<compile_context>
chip_gen: v5e
topology: v5e:2x2
jax: 0.10.0
libtpu: 0.0.40
codegen_flags: <defaults>
</compile_context>

<pallas_src>
import jax
import jax.numpy as jnp
from jax.experimental import pallas as pl
from jax.experimental.pallas import tpu as pltpu


def _fused_separate_mlp_kernel(x_ref, w1_ref, b1_ref, w2_ref, b2_ref, o_ref):
    # x_ref : (B, D)
    # w1_ref: (D, F*H)     b1_ref: (1, F*H)
    # w2_ref: (F*H, F*O)   b2_ref: (1, F*O)   (block-diagonal W2)
    # o_ref : (B, F*O)     lane-dense output slab
    x = x_ref[...]                                                       # (B, D)
    h = jnp.dot(x, w1_ref[...], preferred_element_type=jnp.float32)      # (B, F*H)  MXU
    h = jnp.maximum(h + b1_ref[...], 0.0)                                # bias + ReLU (VPU)
    # TODO(synk): torch.nn.Dropout is identity at inference; training-mode dropout
    # (stateful PRNG mask) is intentionally not emitted here.
    y = jnp.dot(h, w2_ref[...], preferred_element_type=jnp.float32)      # (B, F*O)  MXU
    o_ref[...] = (y + b2_ref[...]).astype(o_ref.dtype)


def separate_binary_classifier(x, w1, b1, w2, b2):
    """x: (B, D); w1: (F, D, H); b1: (F, H); w2: (F, H, O); b2: (F, O).

    Returns (B, F, O), matching the PyTorch module's forward.
    """
    B, D = x.shape
    F, _, H = w1.shape
    O = w2.shape[-1]

    # --- pack parameters once in the wrapper (cheap XLA ops, amortized by jit) ---
    # W1: (F, D, H) -> (D, F*H);  b1: (F, H) -> (1, F*H)
    w1p = jnp.transpose(w1, (1, 0, 2)).reshape(D, F * H)
    b1p = b1.reshape(1, F * H)
    # W2: block-diagonal (F*H, F*O) with w2[f] on block (f, f);  b2: (1, F*O)
    eye_f = jnp.eye(F, dtype=w2.dtype)
    w2bd = (w2[:, :, None, :] * eye_f[:, None, :, None]).reshape(F * H, F * O)
    b2p = b2.reshape(1, F * O)

    flops = 2 * B * D * (F * H) + 2 * B * (F * H) * (F * O)
    bytes_accessed = 4 * (B * D + D * F * H + F * H + F * H * F * O + F * O + B * F * O)

    out_flat = pl.pallas_call(
        _fused_separate_mlp_kernel,
        out_shape=jax.ShapeDtypeStruct((B, F * O), x.dtype),
        # Single invocation (no grid): every operand gets exactly one DMA into VMEM.
        in_specs=[pl.BlockSpec(memory_space=pltpu.MemorySpace.VMEM)] * 5,
        out_specs=pl.BlockSpec(memory_space=pltpu.MemorySpace.VMEM),
        cost_estimate=pl.CostEstimate(
            flops=flops, transcendentals=0, bytes_accessed=bytes_accessed
        ),
    )(x, w1p, b1p, w2bd, b2p)

    # (B, F*O) -> (B, F, O): a free reshape (no transpose / copy kernel).
    return out_flat.reshape(B, F, O)


def init_params(key, input_dim, hidden_dim, output_dim, num_fxns, dtype=jnp.float32):
    """Deterministic, PyTorch-Linear-style uniform(-1/sqrt(fan_in), 1/sqrt(fan_in)) init."""
    k1, k2, k3, k4 = jax.random.split(key, 4)
    lim1 = 1.0 / jnp.sqrt(jnp.array(input_dim, dtype))
    lim2 = 1.0 / jnp.sqrt(jnp.array(hidden_dim, dtype))
    w1 = jax.random.uniform(k1, (num_fxns, input_dim, hidden_dim), dtype, -lim1, lim1)
    b1 = jax.random.uniform(k2, (num_fxns, hidden_dim), dtype, -lim1, lim1)
    w2 = jax.random.uniform(k3, (num_fxns, hidden_dim, output_dim), dtype, -lim2, lim2)
    b2 = jax.random.uniform(k4, (num_fxns, output_dim), dtype, -lim2, lim2)
    return w1, b1, w2, b2


if __name__ == "__main__":
    # Module hyperparameters (small, consistent with the forward semantics).
    input_dim = 32
    output_dim = 2
    num_fxns = 4
    param_budget = 128
    hidden_dim = int(param_budget / num_fxns)   # 32, as in the PyTorch __init__
    batch = 8

    key = jax.random.PRNGKey(0)
    kx, kp = jax.random.split(key)
    x = jax.random.normal(kx, (batch, input_dim), jnp.float32)
    w1, b1, w2, b2 = init_params(kp, input_dim, hidden_dim, output_dim, num_fxns)

    out = jax.jit(separate_binary_classifier)(x, w1, b1, w2, b2)
    out = jax.block_until_ready(out)

    # Pure-JAX reference check.
    h_ref = jnp.maximum(jnp.einsum("bd,fdh->bfh", x, w1) + b1[None], 0.0)
    ref = jnp.einsum("bfh,fho->bfo", h_ref, w2) + b2[None]
    assert out.shape == (batch, num_fxns, output_dim), out.shape
    assert jnp.allclose(out, ref, atol=1e-5, rtol=1e-5)

    print("KERNEL_OK")
</pallas_src>

<mosaic_0001>
module attributes {stable_mosaic.version = 11 : i64} {
  func.func @_fused_separate_mlp_kernel(%arg0: memref<8x32xf32, #tpu.memory_space<vmem>>, %arg1: memref<32x128xf32, #tpu.memory_space<vmem>>, %arg2: memref<1x128xf32, #tpu.memory_space<vmem>>, %arg3: memref<128x8xf32, #tpu.memory_space<vmem>>, %arg4: memref<1x8xf32, #tpu.memory_space<vmem>>, %arg5: memref<8x8xf32, #tpu.memory_space<vmem>>) attributes {dimension_semantics = [], scalar_prefetch = 0 : i64, scratch_operands = 0 : i64, tpu.core_type = #tpu.core_type<tc>} {
    %c0 = arith.constant 0 : index
    %c0_0 = arith.constant 0 : index
    %0 = vector.load %arg0[%c0, %c0_0] : memref<8x32xf32, #tpu.memory_space<vmem>>, vector<8x32xf32>
    %c0_1 = arith.constant 0 : index
    %c0_2 = arith.constant 0 : index
    %1 = vector.load %arg1[%c0_1, %c0_2] : memref<32x128xf32, #tpu.memory_space<vmem>>, vector<32x128xf32>
    %cst = arith.constant dense<0.000000e+00> : vector<8x128xf32>
    %2 = tpu.matmul %0, %1, %cst {dimension_numbers = #tpu.dot_dimension_numbers<[1], [0], [0], [1], [0, 0, 1, 1], [], []>} : vector<8x32xf32>, vector<32x128xf32>, vector<8x128xf32> -> vector<8x128xf32>
    %c0_3 = arith.constant 0 : index
    %c0_4 = arith.constant 0 : index
    %3 = vector.load %arg2[%c0_3, %c0_4] : memref<1x128xf32, #tpu.memory_space<vmem>>, vector<1x128xf32>
    %4 = vector.broadcast %3 : vector<1x128xf32> to vector<8x128xf32>
    %5 = arith.addf %2, %4 : vector<8x128xf32>
    %cst_5 = arith.constant 0.000000e+00 : f32
    %6 = vector.broadcast %cst_5 : f32 to vector<8x128xf32>
    %7 = arith.maximumf %5, %6 : vector<8x128xf32>
    %c0_6 = arith.constant 0 : index
    %c0_7 = arith.constant 0 : index
    %8 = vector.load %arg3[%c0_6, %c0_7] : memref<128x8xf32, #tpu.memory_space<vmem>>, vector<128x8xf32>
    %cst_8 = arith.constant dense<0.000000e+00> : vector<8x8xf32>
    %9 = tpu.matmul %7, %8, %cst_8 {dimension_numbers = #tpu.dot_dimension_numbers<[1], [0], [0], [1], [0, 0, 1, 1], [], []>} : vector<8x128xf32>, vector<128x8xf32>, vector<8x8xf32> -> vector<8x8xf32>
    %c0_9 = arith.constant 0 : index
    %c0_10 = arith.constant 0 : index
    %10 = vector.load %arg4[%c0_9, %c0_10] : memref<1x8xf32, #tpu.memory_space<vmem>>, vector<1x8xf32>
    %11 = vector.broadcast %10 : vector<1x8xf32> to vector<8x8xf32>
    %12 = arith.addf %9, %11 : vector<8x8xf32>
    %c0_11 = arith.constant 0 : index
    %c0_12 = arith.constant 0 : index
    %13 = vector.load %arg5[%c0_11, %c0_12] : memref<8x8xf32, #tpu.memory_space<vmem>>, vector<8x8xf32>
    tpu.vector_store %arg5[%c0_11, %c0_12], %12 {strides = array<i32>} : memref<8x8xf32, #tpu.memory_space<vmem>>, vector<8x8xf32>,
    return
  }
}

</mosaic_0001>

<llo_original>
// kernel: separate_binary_classifier.1
$region0: #{separate_binary_classifier.1}
  #allocation0 [shape = 'u32[]', space=smem, size = 0x4, offset = 0x4, fixed_abs, tag = 'smem constant byte address 0x4 - core index']
  #allocation1 [shape = 'u32[72,128]{1,0:T(1,128)}', space=vmem, size = 0x9000, scoped, tag = 'internal scratch']
  %s0 = inlined_call_operand.vmem [shape: f32[8,32], index: 0, kind: input, shape index: {}]
  %s1 = inlined_call_operand.vmem [shape: f32[32,128], index: 1, kind: input, shape index: {}]
  %s2 = inlined_call_operand.vmem [shape: f32[1,128], index: 2, kind: input, shape index: {}]
  %s3 = inlined_call_operand.vmem [shape: f32[128,8], index: 3, kind: input, shape index: {}]
  %s4 = inlined_call_operand.vmem [shape: f32[1,8], index: 4, kind: input, shape index: {}]
  %s5 = inlined_call_operand.vmem [shape: f32[8,8], index: 5, kind: output, shape index: {}]
  %s6 = sld [smem:[#allocation0]]
  $region30: #{separate_binary_classifier.1} parent=0
    _
  %s8 = ssub.s32 1, %s6
  %s9 = scalar_select 0, %s8, %s6
  // Predicated region
  $region2: #{separate_binary_classifier.1} parent=0 // pred_check
    _
  $region3: #{separate_binary_classifier.1} parent=0 // pred_check_branch
    %11 = sbr.rel (0) target = $region5
  $region4: #{separate_binary_classifier.1} parent=0 // pred_region
    _
  $region5: #{separate_binary_classifier.1} parent=0 // pred_fallthru
    _
  // Predicated region
  $region6: #{separate_binary_classifier.1} parent=0 // pred_check
    _
  $region7: #{separate_binary_classifier.1} parent=0 // pred_check_branch
    %13 = sbr.rel (0) target = $region9
  $region8: #{separate_binary_classifier.1} parent=0 // pred_region
    _
  $region9: #{separate_binary_classifier.1} parent=0 // pred_fallthru
    _
  // Predicated region
  $region10: #{separate_binary_classifier.1} parent=0 // pred_check
    _
  $region11: #{separate_binary_classifier.1} parent=0 // pred_check_branch
    %15 = sbr.rel (0) target = $region13
  $region12: #{separate_binary_classifier.1} parent=0 // pred_region
    _
  $region13: #{separate_binary_classifier.1} parent=0 // pred_fallthru
    _
  // Predicated region
  $region14: #{separate_binary_classifier.1} parent=0 // pred_check
    _
  $region15: #{separate_binary_classifier.1} parent=0 // pred_check_branch
    %17 = sbr.rel (0) target = $region17
  $region16: #{separate_binary_classifier.1} parent=0 // pred_region
    _
  $region17: #{separate_binary_classifier.1} parent=0 // pred_fallthru
    _
  // Predicated region
  $region18: #{separate_binary_classifier.1} parent=0 // pred_check
    _
  $region19: #{separate_binary_classifier.1} parent=0 // pred_check_branch
    %19 = sbr.rel (0) target = $region21
  $region20: #{separate_binary_classifier.1} parent=0 // pred_region
    _
  $region21: #{separate_binary_classifier.1} parent=0 // pred_fallthru
    _
  %v20 = vld [vmem:[%s0] sm:$0xff]
  %v21 = vld [vmem:[%s1] sm:$0xff]
  %v22 = vld [vmem:[%s1 + $0x8] sm:$0xff]
  %v23 = vld [vmem:[%s1 + $0x10] sm:$0xff]
  %v24 = vld [vmem:[%s1 + $0x18] sm:$0xff]
  %v25 = vld [vmem:[%s2] sm:$0x1]
  %v27 = vperm.slane %v25, 0
  %vm29 = vcmask 261120
  %v31 = vsel %vm29, %v20, 0
  %33 = vmatpush.msra.mxu0 0.0
  %34 = vmatpush.msra.mxu0 0.0
  %35 = vmatpush.msra.mxu0 0.0
  %36 = vmatpush.msra.mxu0 0.0
  %37 = vmatpush.msra.mxu0 0.0
  %38 = vmatpush.msra.mxu0 0.0
  %39 = vmatpush.msra.mxu0 0.0
  %40 = vmatpush.msra.mxu0 0.0
  %41 = vmatpush.msra.mxu0 0.0
  %42 = vmatpush.msra.mxu0 0.0
  %43 = vmatpush.msra.mxu0 0.0
  %44 = vmatpush.msra.mxu0 0.0
  %45 = vmatpush.msra.mxu0 %v24
  %46 = vmatpush.msra.mxu0 %v23
  %47 = vmatpush.msra.mxu0 %v22
  %48 = vmatpush.msra.mxu0 %v21
  %49 = vmatmul.f32.gmra.mxu0 %v31
  %v50 = vpop.f32.mrf.mxu0
  %v51 = vadd.f32 %v27, %v50
  %52 = vdwg.mxu0
  %v53 = vmax.f32 %v51, 0.0
  %v54 = vld [vmem:[%s3] sm:$0xff]
  %v55 = vld [vmem:[%s3 + $0x8] sm:$0xff]
  %v56 = vld [vmem:[%s3 + $0x10] sm:$0xff]
  %v57 = vld [vmem:[%s3 + $0x18] sm:$0xff]
  %v58 = vld [vmem:[%s3 + $0x20] sm:$0xff]
  %v59 = vld [vmem:[%s3 + $0x28] sm:$0xff]
  %v60 = vld [vmem:[%s3 + $0x30] sm:$0xff]
  %v61 = vld [vmem:[%s3 + $0x38] sm:$0xff]
  %v62 = vld [vmem:[%s3 + $0x40] sm:$0xff]
  %v63 = vld [vmem:[%s3 + $0x48] sm:$0xff]
  %v64 = vld [vmem:[%s3 + $0x50] sm:$0xff]
  %v65 = vld [vmem:[%s3 + $0x58] sm:$0xff]
  %v66 = vld [vmem:[%s3 + $0x60] sm:$0xff]
  %v67 = vld [vmem:[%s3 + $0x68] sm:$0xff]
  %v68 = vld [vmem:[%s3 + $0x70] sm:$0xff]
  %v69 = vld [vmem:[%s3 + $0x78] sm:$0xff]
  %v70 = vld [vmem:[%s4] sm:$0x1]
  %v72 = vperm.slane %v70, 0
  %74 = vmatpush.msra.mxu0 %v69
  %75 = vmatpush.msra.mxu0 %v68
  %76 = vmatpush.msra.mxu0 %v67
  %77 = vmatpush.msra.mxu0 %v66
  %78 = vmatpush.msra.mxu0 %v65
  %79 = vmatpush.msra.mxu0 %v64
  %80 = vmatpush.msra.mxu0 %v63
  %81 = vmatpush.msra.mxu0 %v62
  %82 = vmatpush.msra.mxu0 %v61
  %83 = vmatpush.msra.mxu0 %v60
  %84 = vmatpush.msra.mxu0 %v59
  %85 = vmatpush.msra.mxu0 %v58
  %86 = vmatpush.msra.mxu0 %v57
  %87 = vmatpush.msra.mxu0 %v56
  %88 = vmatpush.msra.mxu0 %v55
  %89 = vmatpush.msra.mxu0 %v54
  %90 = vmatmul.f32.gmra.mxu0 %v53
  %v91 = vpop.f32.mrf.mxu0
  %v92 = vadd.f32 %v72, %v91
  %93 = vdwg.mxu0
  %vm94 = vcmask 64512
  %95 = vst.msk [vmem:[%s5] sm:$0xff] %vm94, %v92
  // Predicated region
  $region22: #{separate_binary_classifier.1} parent=0 // pred_check
    _
  $region23: #{separate_binary_classifier.1} parent=0 // pred_check_branch
    %97 = sbr.rel (0) target = $region25
  $region24: #{separate_binary_classifier.1} parent=0 // pred_region
    _
  $region25: #{separate_binary_classifier.1} parent=0 // pred_fallthru
    _
  // Predicated region
  $region26: #{separate_binary_classifier.1} parent=0 // pred_check
    _
  $region27: #{separate_binary_classifier.1} parent=0 // pred_check_branch
    %99 = sbr.rel (0) target = $region29
  $region28: #{separate_binary_classifier.1} parent=0 // pred_region
    _
  $region29: #{separate_binary_classifier.1} parent=0 // pred_fallthru
    _

</llo_original>
